<compile_context>
chip_gen: v7x
topology: tpu7x:2x2x1
jax: 0.10.0
libtpu: 0.0.40
codegen_flags: <defaults>
</compile_context>

<pallas_src>
import functools
import math

import jax
import jax.numpy as jnp
from jax.experimental import pallas as pl
from jax.experimental.pallas import tpu as pltpu

# softplus(_RHO_PAD) == 1  =>  at padded positions (mu = 0):
#   sampled value = eps,  KL map = 0.5*eps^2 - 0.5*eps^2 - log(1) = 0.
_RHO_PAD = math.log(math.e - 1.0)


def _fused_vi_mlp_kernel(x_ref, mu_ref, rho_ref, eps_ref, z_ref, kl_ref, *,
                         dims, inv_n_batches):
    """Fused reparameterize + 3x (matmul [+ReLU]) + single KL reduction."""
    mu = mu_ref[...]        # (L, R, C) packed [W ; b ; pad]
    rho = rho_ref[...]
    eps = eps_ref[...]

    # Numerically stable softplus: log(1 + exp(p)) without overflow.
    sigma = jnp.maximum(rho, 0.0) + jnp.log(1.0 + jnp.exp(-jnp.abs(rho)))
    wb = mu + eps * sigma                      # sampled [W ; b] for all layers

    # Single fused KL map over every layer's weights+biases, ONE reduction.
    log_sigma = jnp.where(rho < -20.0, rho, jnp.log(sigma))   # log softplus(p) ~ p
    kl_map = 0.5 * wb * wb - 0.5 * eps * eps - log_sigma
    kl_ref[0, 0] = jnp.sum(kl_map) * inv_n_batches

    # Layer matmuls (MXU).  Bias is the row at index fi of each packed slab;
    # padded columns never feed the next layer (sliced away), so no masking.
    h = x_ref[...]                              # (B, in_size)
    n_layers = len(dims)
    for l, (fi, fo) in enumerate(dims):         # static Python loop (3 iters)
        w = wb[l, 0:fi, :]                      # (fi, C)
        b = wb[l, fi:fi + 1, :]                 # (1, C) bias row, broadcasts
        z = jnp.dot(h, w, preferred_element_type=jnp.float32) + b   # (B, C)
        if l + 1 < n_layers:
            h = jnp.maximum(z, 0.0)[:, 0:dims[l + 1][0]]            # fused ReLU
        else:
            z_ref[...] = z[:, 0:fo]


@functools.partial(jax.jit, static_argnums=(4, 5))
def model_forward(x, mu_packed, rho_packed, noise_key, dims, n_batches):
    """Forward pass.  x: (B, in) f32.  Returns (z (B, out) f32, kl scalar f32)."""
    B = x.shape[0]
    out_size = dims[-1][1]
    # Fresh N(0,1) noise per call (torch.randn analogue), one packed draw.
    eps = jax.random.normal(noise_key, mu_packed.shape, dtype=jnp.float32)

    kernel = functools.partial(_fused_vi_mlp_kernel, dims=dims,
                               inv_n_batches=1.0 / n_batches)
    vmem = pl.BlockSpec(memory_space=pltpu.MemorySpace.VMEM)
    smem = pl.BlockSpec(memory_space=pltpu.MemorySpace.SMEM)

    z, kl = pl.pallas_call(
        kernel,
        out_shape=(jax.ShapeDtypeStruct((B, out_size), jnp.float32),
                   jax.ShapeDtypeStruct((1, 1), jnp.float32)),
        in_specs=[vmem, vmem, vmem, vmem],
        out_specs=(vmem, smem),
    )(x, mu_packed, rho_packed, eps)
    return z, kl[0, 0]


def init_packed_params(key, in_size, hidden_size, out_size):
    """Init matching the PyTorch module, packed once into kernel layout.

    Each layer l occupies slab [l] of a (L, R, C) buffer:
      rows 0..fi-1, cols 0..fo-1 : W        row fi, cols 0..fo-1 : bias
    Padding is KL-neutral: mu_pad = 0, rho_pad = softplus^{-1}(1).
    R, C are rounded to (8, 128) multiples so the slabs are tile-aligned.
    """
    dims = ((in_size, hidden_size), (hidden_size, hidden_size),
            (hidden_size, out_size))
    L = len(dims)
    rows = ((max(fi for fi, _ in dims) + 1 + 7) // 8) * 8          # 40
    cols = ((max(128, max(fo for _, fo in dims)) + 127) // 128) * 128  # 128

    mu = jnp.zeros((L, rows, cols), jnp.float32)
    rho = jnp.full((L, rows, cols), _RHO_PAD, jnp.float32)
    for l, (fi, fo) in enumerate(dims):
        k1, k2 = jax.random.split(jax.random.fold_in(key, l))
        w_mu = 0.001 * jax.random.normal(k1, (fi, fo), jnp.float32)
        w_p = -2.5 + 0.001 * jax.random.normal(k2, (fi, fo), jnp.float32)
        mu = mu.at[l, :fi, :fo].set(w_mu)
        rho = rho.at[l, :fi, :fo].set(w_p)
        mu = mu.at[l, fi, :fo].set(0.0)     # b_mu = 0
        rho = rho.at[l, fi, :fo].set(0.0)   # b_p  = 0
    return dims, mu, rho


if __name__ == "__main__":
    # Small shapes implied by the module: x is (batch, in_size).
    batch, in_size, hidden_size, out_size = 8, 32, 32, 16
    n_batches = 4

    key = jax.random.PRNGKey(0)
    k_params, k_x, k_eps = jax.random.split(key, 3)

    dims, mu_packed, rho_packed = init_packed_params(
        k_params, in_size, hidden_size, out_size)
    x = jax.random.normal(k_x, (batch, in_size), jnp.float32)

    z, kl = model_forward(x, mu_packed, rho_packed, k_eps, dims, n_batches)
    jax.block_until_ready((z, kl))

    assert z.shape == (batch, out_size)
    assert kl.shape == ()
    assert bool(jnp.all(jnp.isfinite(z)))
    assert bool(jnp.isfinite(kl)) and float(kl) > 0.0  # KL >> 0 at this init
    print("KERNEL_OK")
</pallas_src>

<mosaic_0001>
module attributes {stable_mosaic.version = 11 : i64} {
  func.func @_fused_vi_mlp_kernel(%arg0: memref<8x32xf32, #tpu.memory_space<vmem>>, %arg1: memref<3x40x128xf32, #tpu.memory_space<vmem>>, %arg2: memref<3x40x128xf32, #tpu.memory_space<vmem>>, %arg3: memref<3x40x128xf32, #tpu.memory_space<vmem>>, %arg4: memref<8x16xf32, #tpu.memory_space<vmem>>, %arg5: memref<1x1xf32, #tpu.memory_space<smem>>) attributes {dimension_semantics = [], scalar_prefetch = 0 : i64, scratch_operands = 0 : i64, tpu.core_type = #tpu.core_type<tc>} {
    %c0 = arith.constant 0 : index
    %c0_0 = arith.constant 0 : index
    %c0_1 = arith.constant 0 : index
    %0 = vector.load %arg1[%c0, %c0_0, %c0_1] : memref<3x40x128xf32, #tpu.memory_space<vmem>>, vector<3x40x128xf32>
    %c0_2 = arith.constant 0 : index
    %c0_3 = arith.constant 0 : index
    %c0_4 = arith.constant 0 : index
    %1 = vector.load %arg2[%c0_2, %c0_3, %c0_4] : memref<3x40x128xf32, #tpu.memory_space<vmem>>, vector<3x40x128xf32>
    %c0_5 = arith.constant 0 : index
    %c0_6 = arith.constant 0 : index
    %c0_7 = arith.constant 0 : index
    %2 = vector.load %arg3[%c0_5, %c0_6, %c0_7] : memref<3x40x128xf32, #tpu.memory_space<vmem>>, vector<3x40x128xf32>
    %cst = arith.constant 0.000000e+00 : f32
    %3 = vector.broadcast %cst : f32 to vector<3x40x128xf32>
    %4 = arith.maximumf %1, %3 : vector<3x40x128xf32>
    %5 = math.absf %1 : vector<3x40x128xf32>
    %cst_8 = arith.constant 0.000000e+00 : f32
    %6 = vector.broadcast %cst_8 : f32 to vector<3x40x128xf32>
    %7 = arith.subf %6, %5 : vector<3x40x128xf32>
    %8 = math.exp %7 : vector<3x40x128xf32>
    %cst_9 = arith.constant 1.000000e+00 : f32
    %9 = vector.broadcast %cst_9 : f32 to vector<3x40x128xf32>
    %10 = arith.addf %9, %8 : vector<3x40x128xf32>
    %11 = math.log %10 : vector<3x40x128xf32>
    %12 = arith.addf %4, %11 : vector<3x40x128xf32>
    %13 = arith.mulf %2, %12 : vector<3x40x128xf32>
    %14 = arith.addf %0, %13 : vector<3x40x128xf32>
    %cst_10 = arith.constant -2.000000e+01 : f32
    %15 = vector.broadcast %cst_10 : f32 to vector<3x40x128xf32>
    %16 = arith.cmpf olt, %1, %15 : vector<3x40x128xf32>
    %17 = math.log %12 : vector<3x40x128xf32>
    %18 = arith.select %16, %1, %17 : vector<3x40x128xi1>, vector<3x40x128xf32>
    %cst_11 = arith.constant 5.000000e-01 : f32
    %19 = vector.broadcast %cst_11 : f32 to vector<3x40x128xf32>
    %20 = arith.mulf %19, %14 : vector<3x40x128xf32>
    %21 = arith.mulf %20, %14 : vector<3x40x128xf32>
    %cst_12 = arith.constant 5.000000e-01 : f32
    %22 = vector.broadcast %cst_12 : f32 to vector<3x40x128xf32>
    %23 = arith.mulf %22, %2 : vector<3x40x128xf32>
    %24 = arith.mulf %23, %2 : vector<3x40x128xf32>
    %25 = arith.subf %21, %24 : vector<3x40x128xf32>
    %26 = arith.subf %25, %18 : vector<3x40x128xf32>
    %27 = vector.shape_cast %26 : vector<3x40x128xf32> to vector<1x3x40x128xf32>
    %cst_13 = arith.constant dense<0.000000e+00> : vector<1xf32>
    %28 = vector.multi_reduction <add>, %27, %cst_13 [1, 2, 3] : vector<1x3x40x128xf32> to vector<1xf32>
    %29 = vector.shape_cast %28 : vector<1xf32> to vector<1x1x1x1xf32>
    %30 = vector.extract %29[0, 0, 0, 0] : f32 from vector<1x1x1x1xf32>
    %cst_14 = arith.constant 2.500000e-01 : f32
    %31 = arith.mulf %30, %cst_14 : f32
    %c0_15 = arith.constant 0 : index
    %c0_16 = arith.constant 0 : index
    %32 = memref.load %arg5[%c0_15, %c0_16] : memref<1x1xf32, #tpu.memory_space<smem>>
    memref.store %31, %arg5[%c0_15, %c0_16] : memref<1x1xf32, #tpu.memory_space<smem>>
    %c0_17 = arith.constant 0 : index
    %c0_18 = arith.constant 0 : index
    %33 = vector.load %arg0[%c0_17, %c0_18] : memref<8x32xf32, #tpu.memory_space<vmem>>, vector<8x32xf32>
    %34 = vector.extract_strided_slice %14 {offsets = [0, 0, 0], sizes = [1, 32, 128], strides = [1, 1, 1]} : vector<3x40x128xf32> to vector<1x32x128xf32>
    %35 = vector.shape_cast %34 : vector<1x32x128xf32> to vector<32x128xf32>
    %36 = vector.extract_strided_slice %14 {offsets = [0, 32, 0], sizes = [1, 1, 128], strides = [1, 1, 1]} : vector<3x40x128xf32> to vector<1x1x128xf32>
    %37 = vector.shape_cast %36 : vector<1x1x128xf32> to vector<1x128xf32>
    %cst_19 = arith.constant dense<0.000000e+00> : vector<8x128xf32>
    %38 = tpu.matmul %33, %35, %cst_19 {dimension_numbers = #tpu.dot_dimension_numbers<[1], [0], [0], [1], [0, 0, 1, 1], [], []>} : vector<8x32xf32>, vector<32x128xf32>, vector<8x128xf32> -> vector<8x128xf32>
    %39 = vector.broadcast %37 : vector<1x128xf32> to vector<8x128xf32>
    %40 = arith.addf %38, %39 : vector<8x128xf32>
    %cst_20 = arith.constant 0.000000e+00 : f32
    %41 = vector.broadcast %cst_20 : f32 to vector<8x128xf32>
    %42 = arith.maximumf %40, %41 : vector<8x128xf32>
    %43 = vector.extract_strided_slice %42 {offsets = [0, 0], sizes = [8, 32], strides = [1, 1]} : vector<8x128xf32> to vector<8x32xf32>
    %44 = vector.extract_strided_slice %14 {offsets = [1, 0, 0], sizes = [1, 32, 128], strides = [1, 1, 1]} : vector<3x40x128xf32> to vector<1x32x128xf32>
    %45 = vector.shape_cast %44 : vector<1x32x128xf32> to vector<32x128xf32>
    %46 = vector.extract_strided_slice %14 {offsets = [1, 32, 0], sizes = [1, 1, 128], strides = [1, 1, 1]} : vector<3x40x128xf32> to vector<1x1x128xf32>
    %47 = vector.shape_cast %46 : vector<1x1x128xf32> to vector<1x128xf32>
    %cst_21 = arith.constant dense<0.000000e+00> : vector<8x128xf32>
    %48 = tpu.matmul %43, %45, %cst_21 {dimension_numbers = #tpu.dot_dimension_numbers<[1], [0], [0], [1], [0, 0, 1, 1], [], []>} : vector<8x32xf32>, vector<32x128xf32>, vector<8x128xf32> -> vector<8x128xf32>
    %49 = vector.broadcast %47 : vector<1x128xf32> to vector<8x128xf32>
    %50 = arith.addf %48, %49 : vector<8x128xf32>
    %cst_22 = arith.constant 0.000000e+00 : f32
    %51 = vector.broadcast %cst_22 : f32 to vector<8x128xf32>
    %52 = arith.maximumf %50, %51 : vector<8x128xf32>
    %53 = vector.extract_strided_slice %52 {offsets = [0, 0], sizes = [8, 32], strides = [1, 1]} : vector<8x128xf32> to vector<8x32xf32>
    %54 = vector.extract_strided_slice %14 {offsets = [2, 0, 0], sizes = [1, 32, 128], strides = [1, 1, 1]} : vector<3x40x128xf32> to vector<1x32x128xf32>
    %55 = vector.shape_cast %54 : vector<1x32x128xf32> to vector<32x128xf32>
    %56 = vector.extract_strided_slice %14 {offsets = [2, 32, 0], sizes = [1, 1, 128], strides = [1, 1, 1]} : vector<3x40x128xf32> to vector<1x1x128xf32>
    %57 = vector.shape_cast %56 : vector<1x1x128xf32> to vector<1x128xf32>
    %cst_23 = arith.constant dense<0.000000e+00> : vector<8x128xf32>
    %58 = tpu.matmul %53, %55, %cst_23 {dimension_numbers = #tpu.dot_dimension_numbers<[1], [0], [0], [1], [0, 0, 1, 1], [], []>} : vector<8x32xf32>, vector<32x128xf32>, vector<8x128xf32> -> vector<8x128xf32>
    %59 = vector.broadcast %57 : vector<1x128xf32> to vector<8x128xf32>
    %60 = arith.addf %58, %59 : vector<8x128xf32>
    %61 = vector.extract_strided_slice %60 {offsets = [0, 0], sizes = [8, 16], strides = [1, 1]} : vector<8x128xf32> to vector<8x16xf32>
    %c0_24 = arith.constant 0 : index
    %c0_25 = arith.constant 0 : index
    %62 = vector.load %arg4[%c0_24, %c0_25] : memref<8x16xf32, #tpu.memory_space<vmem>>, vector<8x16xf32>
    tpu.vector_store %arg4[%c0_24, %c0_25], %61 {strides = array<i32>} : memref<8x16xf32, #tpu.memory_space<vmem>>, vector<8x16xf32>,
    return
  }
}

</mosaic_0001>

<llo_original>
// kernel: model_forward.1
$region0: #{model_forward.1}
  #allocation0 [shape = 'u32[]', space=smem, size = 0x4, offset = 0x4, fixed_abs, tag = 'smem constant byte address 0x4 - core index']
  #allocation1 [shape = 'u32[144,128]{1,0:T(1,128)}', space=vmem, size = 0x12000, scoped, tag = 'internal scratch']
  %s0 = inlined_call_operand.vmem [shape: f32[8,32], index: 0, kind: input, shape index: {}]
  %s1 = inlined_call_operand.vmem [shape: f32[3,40,128], index: 1, kind: input, shape index: {}]
  %s2 = inlined_call_operand.hbm [shape: f32[3,40,128], index: 2, kind: input, shape index: {}]
  %s3 = inlined_call_operand.vmem [shape: f32[3,40,128], index: 3, kind: input, shape index: {}]
  %s4 = inlined_call_operand.hbm [shape: f32[8,16], index: 4, kind: output, shape index: {0}]
  %s5 = inlined_call_operand.hbm [shape: f32[1,1], index: 5, kind: output, shape index: {1}]
  %6 = xla_tuple %s4, %s5
  %s7 = sld [smem:[#allocation0]]
  $region38: #{model_forward.1} parent=0
    _
  %s9 = ssub.s32 1, %s7
  %s10 = scalar_select 0, %s9, %s7
  $region1: #{model_forward.1} parent=0
    #allocation2 [shape = 'u8[61440]{0}', space=vmem, size = 0xf000, scoped, tag = 'input window, operand 2, single buffered']
    #allocation3 [shape = 's32[1]{0}', space=sflag, size = 0x4, scoped, tag = 'scoped memory for model_forward.1']
    #allocation4 [shape = 's32[1]{0}', space=sflag, size = 0x4, scoped, tag = 'scoped memory for model_forward.1']
    #allocation5 [shape = 's32[1]{0}', space=sflag, size = 0x4, scoped, tag = 'scoped memory for model_forward.1']
    #allocation6 [shape = 'u8[4096]{0}', space=vmem, size = 0x1000, scoped, tag = 'output window, operand 0, single buffered']
    #allocation7 [shape = 'u8[512]{0}', space=smem, size = 0x200, scoped, tag = 'output window, operand 1, single buffered']
    %11 = vsyncpa [#allocation3], 0
    %12 = vsyncpa [#allocation4], 0
    %13 = vsyncpa [#allocation5], 0
    // Predicated region
    $region2: #{model_forward.1} parent=1 // pred_check
      _
    $region3: #{model_forward.1} parent=1 // pred_check_branch
      %15 = sbr.rel (0) target = $region5
    $region4: #{model_forward.1} parent=1 // pred_region
      _
    $region5: #{model_forward.1} parent=1 // pred_fallthru
      _
    // Predicated region
    $region6: #{model_forward.1} parent=1 // pred_check
      _
    $region7: #{model_forward.1} parent=1 // pred_check_branch
      %17 = sbr.rel (0) target = $region9
    $region8: #{model_forward.1} parent=1 // pred_region
      _
    $region9: #{model_forward.1} parent=1 // pred_fallthru
      _
    // Predicated region
    $region10: #{model_forward.1} parent=1 // pred_check
      _
    $region11: #{model_forward.1} parent=1 // pred_check_branch
      %19 = sbr.rel (0) target = $region13
    $region12: #{model_forward.1} parent=1 // pred_region
      %s21 = ssub.s32 1920, 1920
      %22 = vsyncadd [#allocation3], %s21
      %s23 = sshll.u32 [#allocation2], 4
      %s24 = int_to_ptr.vmem [resolvable:$true] %s23
      %29 = dma.hbm_to_vmem [thread:$0]  %s2, 1920, %s24, [#allocation3], 128, 128, 8
    $region13: #{model_forward.1} parent=1 // pred_fallthru
      _
    // Predicated region
    $region14: #{model_forward.1} parent=1 // pred_check
      _
    $region15: #{model_forward.1} parent=1 // pred_check_branch
      %31 = sbr.rel (0) target = $region17
    $region16: #{model_forward.1} parent=1 // pred_region
      _
    $region17: #{model_forward.1} parent=1 // pred_fallthru
      _
    // Predicated region
    $region18: #{model_forward.1} parent=1 // pred_check
      _
    $region19: #{model_forward.1} parent=1 // pred_check_branch
      %33 = sbr.rel (0) target = $region21
    $region20: #{model_forward.1} parent=1 // pred_region
      %34 = dma.done [#allocation3], 1920
    $region21: #{model_forward.1} parent=1 // pred_fallthru
      _
    %v35 = vld [vmem:[%s1] sm:$0xff]
    %v36 = vld [vmem:[%s1 + $0x8] sm:$0xff]
    %v37 = vld [vmem:[%s1 + $0x10] sm:$0xff]
    %v38 = vld [vmem:[%s1 + $0x18] sm:$0xff]
    %v39 = vld [vmem:[%s1 + $0x20] sm:$0xff]
    %v40 = vld [vmem:[%s1 + $0x28] sm:$0xff]
    %v41 = vld [vmem:[%s1 + $0x30] sm:$0xff]
    %v42 = vld [vmem:[%s1 + $0x38] sm:$0xff]
    %v43 = vld [vmem:[%s1 + $0x40] sm:$0xff]
    %v44 = vld [vmem:[%s1 + $0x48] sm:$0xff]
    %v45 = vld [vmem:[%s1 + $0x50] sm:$0xff]
    %v46 = vld [vmem:[%s1 + $0x58] sm:$0xff]
    %v47 = vld [vmem:[%s1 + $0x60] sm:$0xff]
    %v48 = vld [vmem:[%s1 + $0x68] sm:$0xff]
    %v49 = vld [vmem:[%s1 + $0x70] sm:$0xff]
    %v50 = vld [vmem:[#allocation2] sm:$0xff]
    %v51 = vld [vmem:[#allocation2 + $0x8] sm:$0xff]
    %v52 = vld [vmem:[#allocation2 + $0x10] sm:$0xff]
    %v53 = vld [vmem:[#allocation2 + $0x18] sm:$0xff]
    %v54 = vld [vmem:[#allocation2 + $0x20] sm:$0xff]
    %v55 = vld [vmem:[#allocation2 + $0x28] sm:$0xff]
    %v56 = vld [vmem:[#allocation2 + $0x30] sm:$0xff]
    %v57 = vld [vmem:[#allocation2 + $0x38] sm:$0xff]
    %v58 = vld [vmem:[#allocation2 + $0x40] sm:$0xff]
    %v59 = vld [vmem:[#allocation2 + $0x48] sm:$0xff]
    %v60 = vld [vmem:[#allocation2 + $0x50] sm:$0xff]
    %v61 = vld [vmem:[#allocation2 + $0x58] sm:$0xff]
    %v62 = vld [vmem:[#allocation2 + $0x60] sm:$0xff]
    %v63 = vld [vmem:[#allocation2 + $0x68] sm:$0xff]
    %v64 = vld [vmem:[#allocation2 + $0x70] sm:$0xff]
    %v65 = vld [vmem:[%s3] sm:$0xff]
    %v66 = vld [vmem:[%s3 + $0x8] sm:$0xff]
    %v67 = vld [vmem:[%s3 + $0x10] sm:$0xff]
    %v68 = vld [vmem:[%s3 + $0x18] sm:$0xff]
    %v69 = vld [vmem:[%s3 + $0x20] sm:$0xff]
    %v70 = vld [vmem:[%s3 + $0x28] sm:$0xff]
    %v71 = vld [vmem:[%s3 + $0x30] sm:$0xff]
    %v72 = vld [vmem:[%s3 + $0x38] sm:$0xff]
    %v73 = vld [vmem:[%s3 + $0x40] sm:$0xff]
    %v74 = vld [vmem:[%s3 + $0x48] sm:$0xff]
    %v75 = vld [vmem:[%s3 + $0x50] sm:$0xff]
    %v76 = vld [vmem:[%s3 + $0x58] sm:$0xff]
    %v77 = vld [vmem:[%s3 + $0x60] sm:$0xff]
    %v78 = vld [vmem:[%s3 + $0x68] sm:$0xff]
    %v79 = vld [vmem:[%s3 + $0x70] sm:$0xff]
    %v80 = vmax.f32 %v50, 0.0
    %v81 = vmax.f32 %v51, 0.0
    %v82 = vmax.f32 %v52, 0.0
    %v83 = vmax.f32 %v53, 0.0
    %v84 = vmax.f32 %v54, 0.0
    %v85 = vmax.f32 %v55, 0.0
    %v86 = vmax.f32 %v56, 0.0
    %v87 = vmax.f32 %v57, 0.0
    %v88 = vmax.f32 %v58, 0.0
    %v89 = vmax.f32 %v59, 0.0
    %v90 = vmax.f32 %v60, 0.0
    %v91 = vmax.f32 %v61, 0.0
    %v92 = vmax.f32 %v62, 0.0
    %v93 = vmax.f32 %v63, 0.0
    %v94 = vmax.f32 %v64, 0.0
    %v95 = vand.u32 2147483647, %v50
    %v96 = vand.u32 2147483647, %v51
    %v97 = vand.u32 2147483647, %v52
    %v98 = vand.u32 2147483647, %v53
    %v99 = vand.u32 2147483647, %v54
    %v100 = vand.u32 2147483647, %v55
    %v101 = vand.u32 2147483647, %v56
    %v102 = vand.u32 2147483647, %v57
    %v103 = vand.u32 2147483647, %v58
    %v104 = vand.u32 2147483647, %v59
    %v105 = vand.u32 2147483647, %v60
    %v106 = vand.u32 2147483647, %v61
    %v107 = vand.u32 2147483647, %v62
    %v108 = vand.u32 2147483647, %v63
    %v109 = vand.u32 2147483647, %v64
    %v110 = vsub.f32 0.0, %v95
    %v111 = vsub.f32 0.0, %v96
    %v112 = vsub.f32 0.0, %v97
    %v113 = vsub.f32 0.0, %v98
    %v114 = vsub.f32 0.0, %v99
    %v115 = vsub.f32 0.0, %v100
    %v116 = vsub.f32 0.0, %v101
    %v117 = vsub.f32 0.0, %v102
    %v118 = vsub.f32 0.0, %v103
    %v119 = vsub.f32 0.0, %v104
    %v120 = vsub.f32 0.0, %v105
    %v121 = vsub.f32 0.0, %v106
    %v122 = vsub.f32 0.0, %v107
    %v123 = vsub.f32 0.0, %v108
    %v124 = vsub.f32 0.0, %v109
    %v125 = vmul.f32 %v110, 1.442695
    %v126 = vpow.pop %v125
    %v127 = vmul.f32 %v111, 1.442695
    %v128 = vpow.pop %v127
    %v129 = vmul.f32 %v112, 1.442695
    %v130 = vpow.pop %v129
    %v131 = vmul.f32 %v113, 1.442695
    %v132 = vpow.pop %v131
    %v133 = vmul.f32 %v114, 1.442695
    %v134 = vpow.pop %v133
    %v135 = vmul.f32 %v115, 1.442695
    %v136 = vpow.pop %v135
    %v137 = vmul.f32 %v116, 1.442695
    %v138 = vpow.pop %v137
    %v139 = vmul.f32 %v117, 1.442695
    %v140 = vpow.pop %v139
    %v141 = vmul.f32 %v118, 1.442695
    %v142 = vpow.pop %v141
    %v143 = vmul.f32 %v119, 1.442695
    %v144 = vpow.pop %v143
    %v145 = vmul.f32 %v120, 1.442695
    %v146 = vpow.pop %v145
    %v147 = vmul.f32 %v121, 1.442695
    %v148 = vpow.pop %v147
    %v149 = vmul.f32 %v122, 1.442695
    %v150 = vpow.pop %v149
    %v151 = vmul.f32 %v123, 1.442695
    %v152 = vpow.pop %v151
    %v153 = vmul.f32 %v124, 1.442695
    %v154 = vpow.pop %v153
    %v155 = vadd.f32 %v126, 1.0
    %v156 = vadd.f32 %v128, 1.0
    %v157 = vadd.f32 %v130, 1.0
    %v158 = vadd.f32 %v132, 1.0
    %v159 = vadd.f32 %v134, 1.0
    %v160 = vadd.f32 %v136, 1.0
    %v161 = vadd.f32 %v138, 1.0
    %v162 = vadd.f32 %v140, 1.0
    %v163 = vadd.f32 %v142, 1.0
    %v164 = vadd.f32 %v144, 1.0
    %v165 = vadd.f32 %v146, 1.0
    %v166 = vadd.f32 %v148, 1.0
    %v167 = vadd.f32 %v150, 1.0
    %v168 = vadd.f32 %v152, 1.0
    %v169 = vadd.f32 %v154, 1.0
    %v170 = vlog2.pop %v155
    %v171 = vmul.f32 %v170, 0.6931472
    %v172 = vlog2.pop %v156
    %v173 = vmul.f32 %v172, 0.6931472
    %v174 = vlog2.pop %v157
    %v175 = vmul.f32 %v174, 0.6931472
    %v176 = vlog2.pop %v158
    %v177 = vmul.f32 %v176, 0.6931472
    %v178 = vlog2.pop %v159
    %v179 = vmul.f32 %v178, 0.6931472
    %v180 = vlog2.pop %v160
    %v181 = vmul.f32 %v180, 0.6931472
    %v182 = vlog2.pop %v161
    %v183 = vmul.f32 %v182, 0.6931472
    %v184 = vlog2.pop %v162
    %v185 = vmul.f32 %v184, 0.6931472
    %v186 = vlog2.pop %v163
    %v187 = vmul.f32 %v186, 0.6931472
    %v188 = vlog2.pop %v164
    %v189 = vmul.f32 %v188, 0.6931472
    %v190 = vlog2.pop %v165
    %v191 = vmul.f32 %v190, 0.6931472
    %v192 = vlog2.pop %v166
    %v193 = vmul.f32 %v192, 0.6931472
    %v194 = vlog2.pop %v167
    %v195 = vmul.f32 %v194, 0.6931472
    %v196 = vlog2.pop %v168
    %v197 = vmul.f32 %v196, 0.6931472
    %v198 = vlog2.pop %v169
    %v199 = vmul.f32 %v198, 0.6931472
    %v200 = vadd.f32 %v80, %v171
    %v201 = vadd.f32 %v81, %v173
    %v202 = vadd.f32 %v82, %v175
    %v203 = vadd.f32 %v83, %v177
    %v204 = vadd.f32 %v84, %v179
    %v205 = vadd.f32 %v85, %v181
    %v206 = vadd.f32 %v86, %v183
    %v207 = vadd.f32 %v87, %v185
    %v208 = vadd.f32 %v88, %v187
    %v209 = vadd.f32 %v89, %v189
    %v210 = vadd.f32 %v90, %v191
    %v211 = vadd.f32 %v91, %v193
    %v212 = vadd.f32 %v92, %v195
    %v213 = vadd.f32 %v93, %v197
    %v214 = vadd.f32 %v94, %v199
    %v215 = vmul.f32 %v65, %v200
    %v216 = vmul.f32 %v66, %v201
    %v217 = vmul.f32 %v67, %v202
    %v218 = vmul.f32 %v68, %v203
    %v219 = vmul.f32 %v69, %v204
    %v220 = vmul.f32 %v70, %v205
    %v221 = vmul.f32 %v71, %v206
    %v222 = vmul.f32 %v72, %v207
    %v223 = vmul.f32 %v73, %v208
    %v224 = vmul.f32 %v74, %v209
    %v225 = vmul.f32 %v75, %v210
    %v226 = vmul.f32 %v76, %v211
    %v227 = vmul.f32 %v77, %v212
    %v228 = vmul.f32 %v78, %v213
    %v229 = vmul.f32 %v79, %v214
    %v230 = vadd.f32 %v35, %v215
    %v231 = vadd.f32 %v36, %v216
    %v232 = vadd.f32 %v37, %v217
    %v233 = vadd.f32 %v38, %v218
    %v234 = vadd.f32 %v39, %v219
    %v235 = vadd.f32 %v40, %v220
    %v236 = vadd.f32 %v41, %v221
    %v237 = vadd.f32 %v42, %v222
    %v238 = vadd.f32 %v43, %v223
    %v239 = vadd.f32 %v44, %v224
    %v240 = vadd.f32 %v45, %v225
    %v241 = vadd.f32 %v46, %v226
    %v242 = vadd.f32 %v47, %v227
    %v243 = vadd.f32 %v48, %v228
    %v244 = vadd.f32 %v49, %v229
    %vm245 = vcmp.lt.f32.partialorder %v50, -20.0
    %vm246 = vcmp.lt.f32.partialorder %v51, -20.0
    %vm247 = vcmp.lt.f32.partialorder %v52, -20.0
    %vm248 = vcmp.lt.f32.partialorder %v53, -20.0
    %vm249 = vcmp.lt.f32.partialorder %v54, -20.0
    %vm250 = vcmp.lt.f32.partialorder %v55, -20.0
    %vm251 = vcmp.lt.f32.partialorder %v56, -20.0
    %vm252 = vcmp.lt.f32.partialorder %v57, -20.0
    %vm253 = vcmp.lt.f32.partialorder %v58, -20.0
    %vm254 = vcmp.lt.f32.partialorder %v59, -20.0
    %vm255 = vcmp.lt.f32.partialorder %v60, -20.0
    %vm256 = vcmp.lt.f32.partialorder %v61, -20.0
    %vm257 = vcmp.lt.f32.partialorder %v62, -20.0
    %vm258 = vcmp.lt.f32.partialorder %v63, -20.0
    %vm259 = vcmp.lt.f32.partialorder %v64, -20.0
    %v260 = vlog2.pop %v200
    %v261 = vmul.f32 %v260, 0.6931472
    %v262 = vlog2.pop %v201
    %v263 = vmul.f32 %v262, 0.6931472
    %v264 = vlog2.pop %v202
    %v265 = vmul.f32 %v264, 0.6931472
    %v266 = vlog2.pop %v203
    %v267 = vmul.f32 %v266, 0.6931472
    %v268 = vlog2.pop %v204
    %v269 = vmul.f32 %v268, 0.6931472
    %v270 = vlog2.pop %v205
    %v271 = vmul.f32 %v270, 0.6931472
    %v272 = vlog2.pop %v206
    %v273 = vmul.f32 %v272, 0.6931472
    %v274 = vlog2.pop %v207
    %v275 = vmul.f32 %v274, 0.6931472
    %v276 = vlog2.pop %v208
    %v277 = vmul.f32 %v276, 0.6931472
    %v278 = vlog2.pop %v209
    %v279 = vmul.f32 %v278, 0.6931472
    %v280 = vlog2.pop %v210
    %v281 = vmul.f32 %v280, 0.6931472
    %v282 = vlog2.pop %v211
    %v283 = vmul.f32 %v282, 0.6931472
    %v284 = vlog2.pop %v212
    %v285 = vmul.f32 %v284, 0.6931472
    %v286 = vlog2.pop %v213
    %v287 = vmul.f32 %v286, 0.6931472
    %v288 = vlog2.pop %v214
    %v289 = vmul.f32 %v288, 0.6931472
    %v290 = vsel %vm245, %v50, %v261
    %v291 = vsel %vm246, %v51, %v263
    %v292 = vsel %vm247, %v52, %v265
    %v293 = vsel %vm248, %v53, %v267
    %v294 = vsel %vm249, %v54, %v269
    %v295 = vsel %vm250, %v55, %v271
    %v296 = vsel %vm251, %v56, %v273
    %v297 = vsel %vm252, %v57, %v275
    %v298 = vsel %vm253, %v58, %v277
    %v299 = vsel %vm254, %v59, %v279
    %v300 = vsel %vm255, %v60, %v281
    %v301 = vsel %vm256, %v61, %v283
    %v302 = vsel %vm257, %v62, %v285
    %v303 = vsel %vm258, %v63, %v287
    %v304 = vsel %vm259, %v64, %v289
    %v305 = vmul.f32 %v230, 0.5
    %v306 = vmul.f32 %v231, 0.5
    %v307 = vmul.f32 %v232, 0.5
    %v308 = vmul.f32 %v233, 0.5
    %v309 = vmul.f32 %v234, 0.5
    %v310 = vmul.f32 %v235, 0.5
    %v311 = vmul.f32 %v236, 0.5
    %v312 = vmul.f32 %v237, 0.5
    %v313 = vmul.f32 %v238, 0.5
    %v314 = vmul.f32 %v239, 0.5
    %v315 = vmul.f32 %v240, 0.5
    %v316 = vmul.f32 %v241, 0.5
    %v317 = vmul.f32 %v242, 0.5
    %v318 = vmul.f32 %v243, 0.5
    %v319 = vmul.f32 %v244, 0.5
    %v320 = vmul.f32 %v305, %v230
    %v321 = vmul.f32 %v306, %v231
    %v322 = vmul.f32 %v307, %v232
    %v323 = vmul.f32 %v308, %v233
    %v324 = vmul.f32 %v309, %v234
    %v325 = vmul.f32 %v310, %v235
    %v326 = vmul.f32 %v311, %v236
    %v327 = vmul.f32 %v312, %v237
    %v328 = vmul.f32 %v313, %v238
    %v329 = vmul.f32 %v314, %v239
    %v330 = vmul.f32 %v315, %v240
    %v331 = vmul.f32 %v316, %v241
    %v332 = vmul.f32 %v317, %v242
    %v333 = vmul.f32 %v318, %v243
    %v334 = vmul.f32 %v319, %v244
    %v335 = vmul.f32 %v65, 0.5
    %v336 = vmul.f32 %v66, 0.5
    %v337 = vmul.f32 %v67, 0.5
    %v338 = vmul.f32 %v68, 0.5
    %v339 = vmul.f32 %v69, 0.5
    %v340 = vmul.f32 %v70, 0.5
    %v341 = vmul.f32 %v71, 0.5
    %v342 = vmul.f32 %v72, 0.5
    %v343 = vmul.f32 %v73, 0.5
    %v344 = vmul.f32 %v74, 0.5
    %v345 = vmul.f32 %v75, 0.5
    %v346 = vmul.f32 %v76, 0.5
    %v347 = vmul.f32 %v77, 0.5
    %v348 = vmul.f32 %v78, 0.5
    %v349 = vmul.f32 %v79, 0.5
    %v350 = vmul.f32 %v335, %v65
    %v351 = vmul.f32 %v336, %v66
    %v352 = vmul.f32 %v337, %v67
    %v353 = vmul.f32 %v338, %v68
    %v354 = vmul.f32 %v339, %v69
    %v355 = vmul.f32 %v340, %v70
    %v356 = vmul.f32 %v341, %v71
    %v357 = vmul.f32 %v342, %v72
    %v358 = vmul.f32 %v343, %v73
    %v359 = vmul.f32 %v344, %v74
    %v360 = vmul.f32 %v345, %v75
    %v361 = vmul.f32 %v346, %v76
    %v362 = vmul.f32 %v347, %v77
    %v363 = vmul.f32 %v348, %v78
    %v364 = vmul.f32 %v349, %v79
    %v365 = vsub.f32 %v320, %v350
    %v366 = vsub.f32 %v321, %v351
    %v367 = vsub.f32 %v322, %v352
    %v368 = vsub.f32 %v323, %v353
    %v369 = vsub.f32 %v324, %v354
    %v370 = vsub.f32 %v325, %v355
    %v371 = vsub.f32 %v326, %v356
    %v372 = vsub.f32 %v327, %v357
    %v373 = vsub.f32 %v328, %v358
    %v374 = vsub.f32 %v329, %v359
    %v375 = vsub.f32 %v330, %v360
    %v376 = vsub.f32 %v331, %v361
    %v377 = vsub.f32 %v332, %v362
    %v378 = vsub.f32 %v333, %v363
    %v379 = vsub.f32 %v334, %v364
    %v380 = vsub.f32 %v365, %v290
    %v381 = vsub.f32 %v366, %v291
    %v382 = vsub.f32 %v367, %v292
    %v383 = vsub.f32 %v368, %v293
    %v384 = vsub.f32 %v369, %v294
    %v385 = vsub.f32 %v370, %v295
    %v386 = vsub.f32 %v371, %v296
    %v387 = vsub.f32 %v372, %v297
    %v388 = vsub.f32 %v373, %v298
    %v389 = vsub.f32 %v374, %v299
    %v390 = vsub.f32 %v375, %v300
    %v391 = vsub.f32 %v376, %v301
    %v392 = vsub.f32 %v377, %v302
    %v393 = vsub.f32 %v378, %v303
    %v394 = vsub.f32 %v379, %v304
    %v395 = vadd.f32 %v380, %v381
    %v396 = vadd.f32 %v395, %v382
    %v397 = vadd.f32 %v396, %v383
    %v398 = vadd.f32 %v397, %v384
    %v399 = vadd.f32 %v398, %v385
    %v400 = vadd.f32 %v399, %v386
    %v401 = vadd.f32 %v400, %v387
    %v402 = vadd.f32 %v401, %v388
    %v403 = vadd.f32 %v402, %v389
    %v404 = vadd.f32 %v403, %v390
    %v405 = vadd.f32 %v404, %v391
    %v406 = vadd.f32 %v405, %v392
    %v407 = vadd.f32 %v406, %v393
    %v408 = vadd.f32 %v407, %v394
    %409 = vadd.xlane.f32.xlu0 %v408
    %v410 = vpop.xlane.xlu0 %409
    %v411 = vrot.slane %v410, 4
    %v412 = vadd.f32 %v410, %v411
    %v413 = vrot.slane %v412, 2
    %v414 = vadd.f32 %v412, %v413
    %v415 = vrot.slane %v414, 1
    %v416 = vadd.f32 %v414, %v415
    %s417 = vtos %v416
    %s418 = smul.f32 %s417, 0.25
    %s419 = scalar_lea.smem [#allocation7], 0
    %420 = sst [smem:[%s419]] %s418
    %v421 = vld [vmem:[%s0] sm:$0xff]
    %v422 = vlaneseq
    %v423 = vshrl.u32 %v422, 7
    %v424 = vsub.s32 0, %v423
    %v425 = vrot.slane %v234, %v424
    %vm426 = vcmask 261120
    %v428 = vsel %vm426, %v421, 0
    %430 = vmatprep.subr.mxu0 0.0
    %431 = vmatpush1.msra.mxu0 %v230
    %432 = vmatprep.subr.mxu0 0.0
    %433 = vmatpush1.msra.mxu0 %v231
    %434 = vmatprep.subr.mxu0 0.0
    %435 = vmatpush1.msra.mxu0 %v232
    %436 = vmatprep.subr.mxu0 0.0
    %437 = vmatpush1.msra.mxu0 %v233
    %438 = vmatprep.subr.mxu0 0.0
    %439 = vmatpush1.msra.mxu0 0.0
    %440 = vmatprep.subr.mxu0 0.0
    %441 = vmatpush1.msra.mxu0 0.0
    %442 = vmatprep.subr.mxu0 0.0
    %443 = vmatpush1.msra.mxu0 0.0
    %444 = vmatprep.subr.mxu0 0.0
    %445 = vmatpush1.msra.mxu0 0.0
    %446 = vmatprep.subr.mxu0 0.0
    %447 = vmatpush1.msra.mxu0 0.0
    %448 = vmatprep.subr.mxu0 0.0
    %449 = vmatpush1.msra.mxu0 0.0
    %450 = vmatprep.subr.mxu0 0.0
    %451 = vmatpush1.msra.mxu0 0.0
    %452 = vmatprep.subr.mxu0 0.0
    %453 = vmatpush1.msra.mxu0 0.0
    %454 = vmatprep.subr.mxu0 0.0
    %455 = vmatpush1.msra.mxu0 0.0
    %456 = vmatprep.subr.mxu0 0.0
    %457 = vmatpush1.msra.mxu0 0.0
    %458 = vmatprep.subr.mxu0 0.0
    %459 = vmatpush1.msra.mxu0 0.0
    %460 = vmatprep.subr.mxu0 0.0
    %461 = vmatpush1.msra.mxu0 0.0
    %462 = vmatprep.subr.mxu0 0.0
    %463 = vmatpush1.msra.mxu0 0.0
    %464 = vmatprep.subr.mxu0 0.0
    %465 = vmatpush1.msra.mxu0 0.0
    %466 = vmatprep.subr.mxu0 0.0
    %467 = vmatpush1.msra.mxu0 0.0
    %468 = vmatprep.subr.mxu0 0.0
    %469 = vmatpush1.msra.mxu0 0.0
    %470 = vmatprep.subr.mxu0 0.0
    %471 = vmatpush1.msra.mxu0 0.0
    %472 = vmatprep.subr.mxu0 0.0
    %473 = vmatpush1.msra.mxu0 0.0
    %474 = vmatprep.subr.mxu0 0.0
    %475 = vmatpush1.msra.mxu0 0.0
    %476 = vmatprep.subr.mxu0 0.0
    %477 = vmatpush1.msra.mxu0 0.0
    %478 = vmatprep.subr.mxu0 0.0
    %479 = vmatpush1.msra.mxu0 0.0
    %480 = vmatprep.subr.mxu0 0.0
    %481 = vmatpush1.msra.mxu0 0.0
    %482 = vmatprep.subr.mxu0 0.0
    %483 = vmatpush1.msra.mxu0 0.0
    %484 = vmatprep.subr.mxu0 0.0
    %485 = vmatpush1.msra.mxu0 0.0
    %486 = vmatprep.subr.mxu0 0.0
    %487 = vmatpush1.msra.mxu0 0.0
    %488 = vmatprep.subr.mxu0 0.0
    %489 = vmatpush1.msra.mxu0 0.0
    %490 = vmatprep.subr.mxu0 0.0
    %491 = vmatpush1.msra.mxu0 0.0
    %492 = vmatprep.subr.mxu0 0.0
    %493 = vmatpush1.msra.mxu0 0.0
    %494 = vmatprep.mubr.f32.mxu0 0.0
    %495 = vmatmul.mubr.f32.gmra.mrb[0].mxu0 %v428
    %v496 = vpop.f32.mrb[0].mxu0
    %v497 = vadd.f32 %v425, %v496
    %v498 = vpop.f32.mrb[0].mxu0
    %499 = vdwg.mxu0
    %v500 = vmax.f32 %v497, 0.0
    %v501 = vlaneseq
    %v502 = vshrl.u32 %v501, 7
    %v503 = vsub.s32 0, %v502
    %v504 = vrot.slane %v239, %v503
    %v506 = vsel %vm426, %v500, 0
    %508 = vmatprep.subr.mxu0 0.0
    %509 = vmatpush1.msra.mxu0 %v235
    %510 = vmatprep.subr.mxu0 0.0
    %511 = vmatpush1.msra.mxu0 %v236
    %512 = vmatprep.subr.mxu0 0.0
    %513 = vmatpush1.msra.mxu0 %v237
    %514 = vmatprep.subr.mxu0 0.0
    %515 = vmatpush1.msra.mxu0 %v238
    %516 = vmatprep.subr.mxu0 0.0
    %517 = vmatpush1.msra.mxu0 0.0
    %518 = vmatprep.subr.mxu0 0.0
    %519 = vmatpush1.msra.mxu0 0.0
    %520 = vmatprep.subr.mxu0 0.0
    %521 = vmatpush1.msra.mxu0 0.0
    %522 = vmatprep.subr.mxu0 0.0
    %523 = vmatpush1.msra.mxu0 0.0
    %524 = vmatprep.subr.mxu0 0.0
    %525 = vmatpush1.msra.mxu0 0.0
    %526 = vmatprep.subr.mxu0 0.0
    %527 = vmatpush1.msra.mxu0 0.0
    %528 = vmatprep.subr.mxu0 0.0
    %529 = vmatpush1.msra.mxu0 0.0
    %530 = vmatprep.subr.mxu0 0.0
    %531 = vmatpush1.msra.mxu0 0.0
    %532 = vmatprep.subr.mxu0 0.0
    %533 = vmatpush1.msra.mxu0 0.0
    %534 = vmatprep.subr.mxu0 0.0
    %535 = vmatpush1.msra.mxu0 0.0
    %536 = vmatprep.subr.mxu0 0.0
    %537 = vmatpush1.msra.mxu0 0.0
    %538 = vmatprep.subr.mxu0 0.0
    %539 = vmatpush1.msra.mxu0 0.0
    %540 = vmatprep.subr.mxu0 0.0
    %541 = vmatpush1.msra.mxu0 0.0
    %542 = vmatprep.subr.mxu0 0.0
    %543 = vmatpush1.msra.mxu0 0.0
    %544 = vmatprep.subr.mxu0 0.0
    %545 = vmatpush1.msra.mxu0 0.0
    %546 = vmatprep.subr.mxu0 0.0
    %547 = vmatpush1.msra.mxu0 0.0
    %548 = vmatprep.subr.mxu0 0.0
    %549 = vmatpush1.msra.mxu0 0.0
    %550 = vmatprep.subr.mxu0 0.0
    %551 = vmatpush1.msra.mxu0 0.0
    %552 = vmatprep.subr.mxu0 0.0
    %553 = vmatpush1.msra.mxu0 0.0
    %554 = vmatprep.subr.mxu0 0.0
    %555 = vmatpush1.msra.mxu0 0.0
    %556 = vmatprep.subr.mxu0 0.0
    %557 = vmatpush1.msra.mxu0 0.0
    %558 = vmatprep.subr.mxu0 0.0
    %559 = vmatpush1.msra.mxu0 0.0
    %560 = vmatprep.subr.mxu0 0.0
    %561 = vmatpush1.msra.mxu0 0.0
    %562 = vmatprep.subr.mxu0 0.0
    %563 = vmatpush1.msra.mxu0 0.0
    %564 = vmatprep.subr.mxu0 0.0
    %565 = vmatpush1.msra.mxu0 0.0
    %566 = vmatprep.subr.mxu0 0.0
    %567 = vmatpush1.msra.mxu0 0.0
    %568 = vmatprep.subr.mxu0 0.0
    %569 = vmatpush1.msra.mxu0 0.0
    %570 = vmatprep.subr.mxu0 0.0
    %571 = vmatpush1.msra.mxu0 0.0
    %572 = vmatprep.mubr.f32.mxu0 0.0
    %573 = vmatmul.mubr.f32.gmra.mrb[0].mxu0 %v506
    %v574 = vpop.f32.mrb[0].mxu0
    %v575 = vadd.f32 %v504, %v574
    %v576 = vpop.f32.mrb[0].mxu0
    %577 = vdwg.mxu0
    %v578 = vmax.f32 %v575, 0.0
    %v579 = vlaneseq
    %v580 = vshrl.u32 %v579, 7
    %v581 = vsub.s32 0, %v580
    %v582 = vrot.slane %v244, %v581
    %v584 = vsel %vm426, %v578, 0
    %586 = vmatprep.subr.mxu0 0.0
    %587 = vmatpush1.msra.mxu0 %v240
    %588 = vmatprep.subr.mxu0 0.0
    %589 = vmatpush1.msra.mxu0 %v241
    %590 = vmatprep.subr.mxu0 0.0
    %591 = vmatpush1.msra.mxu0 %v242
    %592 = vmatprep.subr.mxu0 0.0
    %593 = vmatpush1.msra.mxu0 %v243
    %594 = vmatprep.subr.mxu0 0.0
    %595 = vmatpush1.msra.mxu0 0.0
    %596 = vmatprep.subr.mxu0 0.0
    %597 = vmatpush1.msra.mxu0 0.0
    %598 = vmatprep.subr.mxu0 0.0
    %599 = vmatpush1.msra.mxu0 0.0
    %600 = vmatprep.subr.mxu0 0.0
    %601 = vmatpush1.msra.mxu0 0.0
    %602 = vmatprep.subr.mxu0 0.0
    %603 = vmatpush1.msra.mxu0 0.0
    %604 = vmatprep.subr.mxu0 0.0
    %605 = vmatpush1.msra.mxu0 0.0
    %606 = vmatprep.subr.mxu0 0.0
    %607 = vmatpush1.msra.mxu0 0.0
    %608 = vmatprep.subr.mxu0 0.0
    %609 = vmatpush1.msra.mxu0 0.0
    %610 = vmatprep.subr.mxu0 0.0
    %611 = vmatpush1.msra.mxu0 0.0
    %612 = vmatprep.subr.mxu0 0.0
    %613 = vmatpush1.msra.mxu0 0.0
    %614 = vmatprep.subr.mxu0 0.0
    %615 = vmatpush1.msra.mxu0 0.0
    %616 = vmatprep.subr.mxu0 0.0
    %617 = vmatpush1.msra.mxu0 0.0
    %618 = vmatprep.subr.mxu0 0.0
    %619 = vmatpush1.msra.mxu0 0.0
    %620 = vmatprep.subr.mxu0 0.0
    %621 = vmatpush1.msra.mxu0 0.0
    %622 = vmatprep.subr.mxu0 0.0
    %623 = vmatpush1.msra.mxu0 0.0
    %624 = vmatprep.subr.mxu0 0.0
    %625 = vmatpush1.msra.mxu0 0.0
    %626 = vmatprep.subr.mxu0 0.0
    %627 = vmatpush1.msra.mxu0 0.0
    %628 = vmatprep.subr.mxu0 0.0
    %629 = vmatpush1.msra.mxu0 0.0
    %630 = vmatprep.subr.mxu0 0.0
    %631 = vmatpush1.msra.mxu0 0.0
    %632 = vmatprep.subr.mxu0 0.0
    %633 = vmatpush1.msra.mxu0 0.0
    %634 = vmatprep.subr.mxu0 0.0
    %635 = vmatpush1.msra.mxu0 0.0
    %636 = vmatprep.subr.mxu0 0.0
    %637 = vmatpush1.msra.mxu0 0.0
    %638 = vmatprep.subr.mxu0 0.0
    %639 = vmatpush1.msra.mxu0 0.0
    %640 = vmatprep.subr.mxu0 0.0
    %641 = vmatpush1.msra.mxu0 0.0
    %642 = vmatprep.subr.mxu0 0.0
    %643 = vmatpush1.msra.mxu0 0.0
    %644 = vmatprep.subr.mxu0 0.0
    %645 = vmatpush1.msra.mxu0 0.0
    %646 = vmatprep.subr.mxu0 0.0
    %647 = vmatpush1.msra.mxu0 0.0
    %648 = vmatprep.subr.mxu0 0.0
    %649 = vmatpush1.msra.mxu0 0.0
    %650 = vmatprep.mubr.f32.mxu0 0.0
    %651 = vmatmul.mubr.f32.gmra.mrb[0].mxu0 %v584
    %v652 = vpop.f32.mrb[0].mxu0
    %v653 = vadd.f32 %v582, %v652
    %v654 = vpop.f32.mrb[0].mxu0
    %655 = vdwg.mxu0
    %vm656 = vcmask 130048
    %657 = vst.msk [vmem:[#allocation6] sm:$0xff] %vm656, %v653
    // Predicated region
    $region22: #{model_forward.1} parent=1 // pred_check
      _
    $region23: #{model_forward.1} parent=1 // pred_check_branch
      %659 = sbr.rel (0) target = $region25
    $region24: #{model_forward.1} parent=1 // pred_region
      %s661 = ssub.s32 128, 128
      %662 = vsyncadd [#allocation4], %s661
      %s664 = sshll.u32 [#allocation6], 4
      %s665 = int_to_ptr.vmem [resolvable:$true] %s664
      %667 = dma.vmem_to_hbm [thread:$0]  %s665, 128, %s4, [#allocation4]
    $region25: #{model_forward.1} parent=1 // pred_fallthru
      _
    // Predicated region
    $region26: #{model_forward.1} parent=1 // pred_check
      _
    $region27: #{model_forward.1} parent=1 // pred_check_branch
      %669 = sbr.rel (0) target = $region29
    $region28: #{model_forward.1} parent=1 // pred_region
      %s671 = ssub.s32 16, 16
      %672 = vsyncadd [#allocation5], %s671
      %675 = dma.smem_to_hbm [#allocation7], 16, %s5, [#allocation5]
    $region29: #{model_forward.1} parent=1 // pred_fallthru
      _
    // Predicated region
    $region30: #{model_forward.1} parent=1 // pred_check
      _
    $region31: #{model_forward.1} parent=1 // pred_check_branch
      %677 = sbr.rel (0) target = $region33
    $region32: #{model_forward.1} parent=1 // pred_region
      %678 = dma.done [#allocation4], 128
    $region33: #{model_forward.1} parent=1 // pred_fallthru
      _
    // Predicated region
    $region34: #{model_forward.1} parent=1 // pred_check
      _
    $region35: #{model_forward.1} parent=1 // pred_check_branch
      %680 = sbr.rel (0) target = $region37
    $region36: #{model_forward.1} parent=1 // pred_region
      %681 = dma.done [#allocation5], 16
    $region37: #{model_forward.1} parent=1 // pred_fallthru
      _
    %682 = sfence
    %683 = vsyncpa [#allocation3], 1
    %684 = vsyncpa [#allocation4], 1
    %685 = vsyncpa [#allocation5], 1

</llo_original>
